<compile_context>
chip_gen: v7x
topology: tpu7x:2x2x1
jax: 0.10.0
libtpu: 0.0.40
codegen_flags: <defaults>
</compile_context>

<pallas_src>
import functools

import jax
import jax.numpy as jnp
from jax.experimental import pallas as pl
from jax.experimental.pallas import tpu as pltpu


# ---------------------------------------------------------------------------
# Kernel helpers
# ---------------------------------------------------------------------------

def _affine(w, b_f32, x, use_mxu):
    """y = w @ x + b with f32 accumulation.

    w     : (C_out, C_in) weight. Native dtype on the MXU path, f32 on the
                          VPU path (pre-cast once in the wrapper).
    b_f32 : (C_out, 1)    bias, already f32 (pre-cast in the wrapper).
    x     : (C_in, tp)    activation tile (channels on sublanes, pixels on lanes).
    """
    if use_mxu:
        y = jnp.dot(w, x, preferred_element_type=jnp.float32)
    else:
        # Tiny contraction dim: unrolled VPU multiply-accumulate over C_in.
        # w is f32 already; a bf16 x promotes to f32 automatically, so no
        # per-step casts are emitted here.
        c_in = w.shape[1]
        y = w[:, 0:1] * x[0:1, :]
        for c in range(1, c_in):
            y = y + w[:, c:c + 1] * x[c:c + 1, :]
    return y + b_f32


def _aggnet_kernel(x_ref, wh_ref, bh_ref, wf_ref, bf_ref, o_ref,
                   *, n_hidden, relu, use_mxu):
    """layers > 1 : fused chain of hidden 1x1 convs + final 1x1 conv."""
    x = x_ref[...]                                   # (C_in, tp)
    for l in range(n_hidden):                        # static unroll
        y = _affine(wh_ref[l], bh_ref[l], x, use_mxu)
        if relu:
            y = jnp.maximum(y, 0.0)
        # Match the per-layer storage dtype of the PyTorch module (real cast
        # only for sub-f32 activations; no-op for f32).
        x = y.astype(x_ref.dtype)
    y = _affine(wf_ref[...], bf_ref[...], x, use_mxu)
    o_ref[...] = y.astype(o_ref.dtype)               # (C_out, tp), lane-dense


def _aggnet_final_kernel(x_ref, wf_ref, bf_ref, o_ref, *, use_mxu):
    """layers == 1 : only the final 1x1 conv."""
    y = _affine(wf_ref[...], bf_ref[...], x_ref[...], use_mxu)
    o_ref[...] = y.astype(o_ref.dtype)


# ---------------------------------------------------------------------------
# Hardware queries (best-effort, with conservative fallbacks)
# ---------------------------------------------------------------------------

def _vmem_capacity_bytes():
    """Physical VMEM per TensorCore; fallback = v7x's 64 MiB (smallest)."""
    try:
        return int(pltpu.get_tpu_info().vmem_capacity_bytes)
    except Exception:
        return 64 << 20


def _num_tensorcores():
    """TensorCores one kernel can shard a parallel grid across (megacore)."""
    try:
        kind = jax.devices()[0].device_kind.lower()
    except Exception:
        return 1
    if "lite" in kind or "v5e" in kind or "v6e" in kind:
        return 1                      # v5e / v6e: single TensorCore per chip
    if "v7" in kind or "7x" in kind or "v4" in kind or "v5p" in kind:
        return 2                      # v7x (2 TC/chip) and megacore chips
    return 1


# ---------------------------------------------------------------------------
# Tiling heuristic
# ---------------------------------------------------------------------------

def _round_down_128(v):
    return (v // 128) * 128


def _choose_pixel_tile(hw, bytes_per_pixel, n_batch, num_tc,
                       target_bytes=1 << 20, min_step_bytes=256 << 10):
    """Pixel (lane) tile sized by bytes per grid step, not lane count.

    The op is HBM-bandwidth bound: each grid step should move ~0.5-2 MiB of
    activations so the ~0.35 us (~600 cycle) per-step pipeline overhead is
    amortised.  Single-TC chips keep the largest tile; only multi-TC chips
    split further, and never below min_step_bytes per step.
    """
    tp = max(128, _round_down_128(target_bytes // bytes_per_pixel))
    if tp >= hw:
        # One block covers the whole pixel axis.  A block dim equal to the
        # full array dim needs no 128-alignment, so no padding is required.
        tp = hw
    else:
        # Prefer a tile that divides hw (avoids a mostly-empty last step),
        # but never shrink below half the byte-budget target to get it.
        lo = max(128, _round_down_128(tp // 2))
        t = tp
        while t >= lo:
            if hw % t == 0:
                tp = t
                break
            t -= 128
    if num_tc > 1:
        # Megacore (e.g. v7x): give each TensorCore >= 2 parallel steps,
        # splitting the pixel axis (works for N == 1 too), but keep the tile
        # above min_step_bytes so per-step overhead never dominates again.
        while (n_batch * (-(-hw // tp)) < 2 * num_tc
               and tp > 128
               and (tp // 2) * bytes_per_pixel >= min_step_bytes):
            new_tp = max(128, _round_down_128(tp // 2))
            if new_tp >= tp:
                break
            tp = new_tp
    return tp


# ---------------------------------------------------------------------------
# Wrapper
# ---------------------------------------------------------------------------

def aggregate_net_forward(x_nchw, params, *, layers, relu=True,
                          target_tile_bytes=1 << 20):
    """Run AggregateNet forward.

    x_nchw : (N, C_in, H, W)
    params : dict with PyTorch-style (out, in) 1x1-conv weights
        'wh' : (layers-1, C_in, C_in)  hidden weights (y = W @ x)
        'bh' : (layers-1, C_in, 1)     hidden biases
        'wf' : (C_out, C_in)           final weight
        'bf' : (C_out, 1)              final bias
    Returns (N, C_out, H, W).
    """
    N, C_in, H, W = x_nchw.shape
    C_out = params["wf"].shape[0]
    dtype = x_nchw.dtype
    HW = H * W
    n_hidden = max(layers - 1, 0)
    itemsize = jnp.dtype(dtype).itemsize

    # Below ~64 contraction channels the MXU is pure push/pop overhead; use
    # the unrolled VPU multiply-accumulate instead.
    use_mxu = C_in >= 64
    w_dtype = dtype if use_mxu else jnp.float32

    # Hoist all per-grid-step casts into the wrapper: biases always f32,
    # VPU-path weights f32 (weights are tiny; extra HBM bytes negligible).
    wf = params["wf"].astype(w_dtype)
    bf = params["bf"].astype(jnp.float32)
    if n_hidden > 0:
        wh = params["wh"].astype(w_dtype)
        bh = params["bh"].astype(jnp.float32)

    # NCHW viewed as (N, C_in, H*W): free reshape, no transpose, no padding.
    x3 = x_nchw.reshape(N, C_in, HW)

    num_tc = _num_tensorcores()
    bytes_per_pixel = (C_in + C_out) * itemsize
    tp = _choose_pixel_tile(HW, bytes_per_pixel, N, num_tc,
                            target_bytes=target_tile_bytes)
    p_steps = -(-HW // tp)
    grid = (N, p_steps)

    # Weight / bias VMEM footprint (single copy).
    w_itemsize = jnp.dtype(w_dtype).itemsize
    w_bytes = int(n_hidden * C_in * C_in * w_itemsize + n_hidden * C_in * 4
                  + C_out * C_in * w_itemsize + C_out * 4)
    # Weights/biases have a constant index_map, so double-buffering them only
    # burns VMEM.  pl.Buffered(1) is applied above a size threshold (it
    # matters on v7x's 64 MiB VMEM for deep/wide configs); small configs keep
    # the default pipelining path.
    single_buffer_weights = w_bytes > (1 << 20)
    # TODO(synk): if n_hidden * C_in^2 is too large for VMEM even single
    # buffered, stream one hidden layer's weights at a time via manual DMA.

    def _const_spec(shape):
        zeros = (0,) * len(shape)
        index_map = lambda n, p: zeros
        if single_buffer_weights:
            try:
                return pl.BlockSpec(shape, index_map,
                                    pipeline_mode=pl.Buffered(1))
            except TypeError:          # older jax without pipeline_mode
                pass
        return pl.BlockSpec(shape, index_map)

    in_spec = pl.BlockSpec((None, C_in, tp), lambda n, p: (n, 0, p))
    out_spec = pl.BlockSpec((None, C_out, tp), lambda n, p: (n, 0, p))
    wf_spec = _const_spec((C_out, C_in))
    bf_spec = _const_spec((C_out, 1))

    # VMEM budget: double-buffered activation tiles + resident weights +
    # headroom for f32 intermediates, clamped to the chip's physical VMEM
    # (64 MiB per TensorCore on v7x) minus headroom.
    tile_bytes = tp * bytes_per_pixel
    needed = (2 * tile_bytes
              + (1 if single_buffer_weights else 2) * w_bytes
              + 4 * tp * max(C_in, C_out) * 4
              + (8 << 20))
    cap = _vmem_capacity_bytes()
    vmem_limit = int(min(max(needed, 32 << 20),
                         max(cap - (8 << 20), 16 << 20),
                         128 << 20))

    flops = 2 * N * HW * (n_hidden * C_in * C_in + C_in * C_out)
    bytes_accessed = int(itemsize * N * HW * (C_in + C_out) + w_bytes)
    cost = pl.CostEstimate(flops=int(flops), transcendentals=0,
                           bytes_accessed=bytes_accessed)

    cparams = pltpu.CompilerParams(
        dimension_semantics=("parallel", "parallel"),
        vmem_limit_bytes=vmem_limit)

    if layers > 1:
        wh_spec = _const_spec((n_hidden, C_in, C_in))
        bh_spec = _const_spec((n_hidden, C_in, 1))
        kernel = functools.partial(_aggnet_kernel, n_hidden=n_hidden,
                                   relu=relu, use_mxu=use_mxu)
        out3 = pl.pallas_call(
            kernel,
            out_shape=jax.ShapeDtypeStruct((N, C_out, HW), dtype),
            grid=grid,
            in_specs=[in_spec, wh_spec, bh_spec, wf_spec, bf_spec],
            out_specs=out_spec,
            compiler_params=cparams,
            cost_estimate=cost,
        )(x3, wh, bh, wf, bf)
    else:
        kernel = functools.partial(_aggnet_final_kernel, use_mxu=use_mxu)
        out3 = pl.pallas_call(
            kernel,
            out_shape=jax.ShapeDtypeStruct((N, C_out, HW), dtype),
            grid=grid,
            in_specs=[in_spec, wf_spec, bf_spec],
            out_specs=out_spec,
            compiler_params=cparams,
            cost_estimate=cost,
        )(x3, wf, bf)

    return out3.reshape(N, C_out, H, W)   # free reshape back to NCHW


# ---------------------------------------------------------------------------
# Params + pure-JAX reference
# ---------------------------------------------------------------------------

def init_params(key, in_channels, out_channels, layers, dtype=jnp.float32):
    """Deterministic init mimicking torch Conv2d default (uniform +-1/sqrt(fan_in))."""
    n_hidden = max(layers - 1, 0)
    keys = jax.random.split(key, 4)
    bound = 1.0 / float(in_channels) ** 0.5   # fan_in = in_channels * 1 * 1
    params = {}
    if n_hidden > 0:
        params["wh"] = jax.random.uniform(
            keys[0], (n_hidden, in_channels, in_channels), dtype,
            minval=-bound, maxval=bound)
        params["bh"] = jax.random.uniform(
            keys[1], (n_hidden, in_channels, 1), dtype,
            minval=-bound, maxval=bound)
    params["wf"] = jax.random.uniform(
        keys[2], (out_channels, in_channels), dtype,
        minval=-bound, maxval=bound)
    params["bf"] = jax.random.uniform(
        keys[3], (out_channels, 1), dtype,
        minval=-bound, maxval=bound)
    return params


def reference_forward(x_nchw, params, *, layers, relu=True):
    """Pure-JAX reference of the PyTorch forward (channels-major layout)."""
    N, C_in, H, W = x_nchw.shape
    x = x_nchw.reshape(N, C_in, H * W).astype(jnp.float32)
    if layers > 1:
        for l in range(layers - 1):
            w = params["wh"][l].astype(jnp.float32)
            b = params["bh"][l].astype(jnp.float32)[None]
            x = jnp.einsum("oc,ncp->nop", w, x, precision="highest") + b
            if relu:
                x = jnp.maximum(x, 0.0)
    wf = params["wf"].astype(jnp.float32)
    bf = params["bf"].astype(jnp.float32)[None]
    x = jnp.einsum("oc,ncp->nop", wf, x, precision="highest") + bf
    C_out = params["wf"].shape[0]
    return x.reshape(N, C_out, H, W).astype(x_nchw.dtype)


if __name__ == "__main__":
    def _check(out, ref, tol=1e-5):
        assert out.shape == ref.shape, (out.shape, ref.shape)
        err = float(jnp.max(jnp.abs(out.astype(jnp.float32)
                                    - ref.astype(jnp.float32))))
        assert err <= tol, err

    k1, k2, k3, k4, k5, k6, k7, k8 = jax.random.split(jax.random.PRNGKey(0), 8)

    # Config 1: the module's typical use case -- tiny channel counts.
    # N=2, C_in=4, H=W=16, C_out=3, layers=2, relu=True, bias=True.
    # TODO(synk): final_activation is an arbitrary torch callable (None in
    # this config); it is not emulated here.
    x1 = jax.random.normal(k1, (2, 4, 16, 16), jnp.float32)
    p1 = init_params(k2, 4, 3, layers=2)
    o1 = jax.block_until_ready(
        aggregate_net_forward(x1, p1, layers=2, relu=True))
    _check(o1, reference_forward(x1, p1, layers=2, relu=True))

    # Config 2: layers=1 with a spatial size that is NOT a multiple of 128;
    # the block covers the full pixel axis, so no padding anywhere.
    x2 = jax.random.normal(k3, (1, 4, 10, 10), jnp.float32)
    p2 = init_params(k4, 4, 3, layers=1)
    o2 = jax.block_until_ready(
        aggregate_net_forward(x2, p2, layers=1, relu=True))
    _check(o2, reference_forward(x2, p2, layers=1, relu=True))

    # Config 3: force a multi-step pixel grid with a ragged last block
    # (HW=1600, tile=1024) to exercise Pallas' block-boundary clipping in
    # place of the old wrapper-side pad + slice.
    x3 = jax.random.normal(k5, (1, 4, 40, 40), jnp.float32)
    p3 = init_params(k6, 4, 3, layers=2)
    o3 = jax.block_until_ready(
        aggregate_net_forward(x3, p3, layers=2, relu=True,
                              target_tile_bytes=28 * 1024))
    _check(o3, reference_forward(x3, p3, layers=2, relu=True))

    # Config 4: larger channel count exercising the MXU path (loose tolerance
    # vs the highest-precision f32 reference because the in-kernel f32 dot
    # uses the MXU's default precision).
    x4 = jax.random.normal(k7, (1, 64, 16, 16), jnp.float32)
    p4 = init_params(k8, 64, 8, layers=2)
    o4 = jax.block_until_ready(
        aggregate_net_forward(x4, p4, layers=2, relu=True))
    _check(o4, reference_forward(x4, p4, layers=2, relu=True), tol=5e-2)

    print("KERNEL_OK")
</pallas_src>

<mosaic_0001>
module attributes {stable_mosaic.version = 11 : i64} {
  func.func @_aggnet_kernel(%arg0: i32, %arg1: i32, %arg2: memref<1x4x256xf32, #tpu.memory_space<vmem>>, %arg3: memref<1x4x4xf32, #tpu.memory_space<vmem>>, %arg4: memref<1x4x1xf32, #tpu.memory_space<vmem>>, %arg5: memref<3x4xf32, #tpu.memory_space<vmem>>, %arg6: memref<3x1xf32, #tpu.memory_space<vmem>>, %arg7: memref<1x3x256xf32, #tpu.memory_space<vmem>>) attributes {dimension_semantics = [#tpu.dimension_semantics<parallel>, #tpu.dimension_semantics<parallel>], iteration_bounds = array<i64: 2, 1>, scalar_prefetch = 0 : i64, scratch_operands = 0 : i64, tpu.core_type = #tpu.core_type<tc>, window_params = [{transform_indices = @transform_0, window_bounds = array<i64: 1, 4, 256>}, {pipeline_mode = #tpu.pipeline_mode<synchronous>, transform_indices = @transform_1, window_bounds = array<i64: 1, 4, 4>}, {pipeline_mode = #tpu.pipeline_mode<synchronous>, transform_indices = @transform_2, window_bounds = array<i64: 1, 4, 1>}, {pipeline_mode = #tpu.pipeline_mode<synchronous>, transform_indices = @transform_3, window_bounds = array<i64: 3, 4>}, {pipeline_mode = #tpu.pipeline_mode<synchronous>, transform_indices = @transform_4, window_bounds = array<i64: 3, 1>}, {transform_indices = @transform_5, window_bounds = array<i64: 1, 3, 256>}]} {
    %c0 = arith.constant 0 : index
    %c0_0 = arith.constant 0 : index
    %c0_1 = arith.constant 0 : index
    %0 = vector.load %arg2[%c0, %c0_0, %c0_1] : memref<1x4x256xf32, #tpu.memory_space<vmem>>, vector<1x4x256xf32>
    %1 = vector.shape_cast %0 : vector<1x4x256xf32> to vector<4x256xf32>
    %c0_2 = arith.constant 0 : index
    %c0_3 = arith.constant 0 : index
    %c0_4 = arith.constant 0 : index
    %2 = vector.load %arg3[%c0_2, %c0_3, %c0_4] : memref<1x4x4xf32, #tpu.memory_space<vmem>>, vector<1x4x4xf32>
    %3 = vector.shape_cast %2 : vector<1x4x4xf32> to vector<4x4xf32>
    %c0_5 = arith.constant 0 : index
    %c0_6 = arith.constant 0 : index
    %c0_7 = arith.constant 0 : index
    %4 = vector.load %arg4[%c0_5, %c0_6, %c0_7] : memref<1x4x1xf32, #tpu.memory_space<vmem>>, vector<1x4x1xf32>
    %5 = vector.shape_cast %4 : vector<1x4x1xf32> to vector<4x1xf32>
    %6 = vector.extract_strided_slice %3 {offsets = [0, 0], sizes = [4, 1], strides = [1, 1]} : vector<4x4xf32> to vector<4x1xf32>
    %7 = vector.extract_strided_slice %1 {offsets = [0, 0], sizes = [1, 256], strides = [1, 1]} : vector<4x256xf32> to vector<1x256xf32>
    %8 = vector.broadcast %6 : vector<4x1xf32> to vector<4x256xf32>
    %9 = vector.broadcast %7 : vector<1x256xf32> to vector<4x256xf32>
    %10 = arith.mulf %8, %9 : vector<4x256xf32>
    %11 = vector.extract_strided_slice %3 {offsets = [0, 1], sizes = [4, 1], strides = [1, 1]} : vector<4x4xf32> to vector<4x1xf32>
    %12 = vector.extract_strided_slice %1 {offsets = [1, 0], sizes = [1, 256], strides = [1, 1]} : vector<4x256xf32> to vector<1x256xf32>
    %13 = vector.broadcast %11 : vector<4x1xf32> to vector<4x256xf32>
    %14 = vector.broadcast %12 : vector<1x256xf32> to vector<4x256xf32>
    %15 = arith.mulf %13, %14 : vector<4x256xf32>
    %16 = arith.addf %10, %15 : vector<4x256xf32>
    %17 = vector.extract_strided_slice %3 {offsets = [0, 2], sizes = [4, 1], strides = [1, 1]} : vector<4x4xf32> to vector<4x1xf32>
    %18 = vector.extract_strided_slice %1 {offsets = [2, 0], sizes = [1, 256], strides = [1, 1]} : vector<4x256xf32> to vector<1x256xf32>
    %19 = vector.broadcast %17 : vector<4x1xf32> to vector<4x256xf32>
    %20 = vector.broadcast %18 : vector<1x256xf32> to vector<4x256xf32>
    %21 = arith.mulf %19, %20 : vector<4x256xf32>
    %22 = arith.addf %16, %21 : vector<4x256xf32>
    %23 = vector.extract_strided_slice %3 {offsets = [0, 3], sizes = [4, 1], strides = [1, 1]} : vector<4x4xf32> to vector<4x1xf32>
    %24 = vector.extract_strided_slice %1 {offsets = [3, 0], sizes = [1, 256], strides = [1, 1]} : vector<4x256xf32> to vector<1x256xf32>
    %25 = vector.broadcast %23 : vector<4x1xf32> to vector<4x256xf32>
    %26 = vector.broadcast %24 : vector<1x256xf32> to vector<4x256xf32>
    %27 = arith.mulf %25, %26 : vector<4x256xf32>
    %28 = arith.addf %22, %27 : vector<4x256xf32>
    %29 = vector.broadcast %5 : vector<4x1xf32> to vector<4x256xf32>
    %30 = arith.addf %28, %29 : vector<4x256xf32>
    %cst = arith.constant 0.000000e+00 : f32
    %31 = vector.broadcast %cst : f32 to vector<4x256xf32>
    %32 = arith.maximumf %30, %31 : vector<4x256xf32>
    %c0_8 = arith.constant 0 : index
    %c0_9 = arith.constant 0 : index
    %33 = vector.load %arg5[%c0_8, %c0_9] : memref<3x4xf32, #tpu.memory_space<vmem>>, vector<3x4xf32>
    %c0_10 = arith.constant 0 : index
    %c0_11 = arith.constant 0 : index
    %34 = vector.load %arg6[%c0_10, %c0_11] : memref<3x1xf32, #tpu.memory_space<vmem>>, vector<3x1xf32>
    %35 = vector.extract_strided_slice %33 {offsets = [0, 0], sizes = [3, 1], strides = [1, 1]} : vector<3x4xf32> to vector<3x1xf32>
    %36 = vector.extract_strided_slice %32 {offsets = [0, 0], sizes = [1, 256], strides = [1, 1]} : vector<4x256xf32> to vector<1x256xf32>
    %37 = vector.broadcast %35 : vector<3x1xf32> to vector<3x256xf32>
    %38 = vector.broadcast %36 : vector<1x256xf32> to vector<3x256xf32>
    %39 = arith.mulf %37, %38 : vector<3x256xf32>
    %40 = vector.extract_strided_slice %33 {offsets = [0, 1], sizes = [3, 1], strides = [1, 1]} : vector<3x4xf32> to vector<3x1xf32>
    %41 = vector.extract_strided_slice %32 {offsets = [1, 0], sizes = [1, 256], strides = [1, 1]} : vector<4x256xf32> to vector<1x256xf32>
    %42 = vector.broadcast %40 : vector<3x1xf32> to vector<3x256xf32>
    %43 = vector.broadcast %41 : vector<1x256xf32> to vector<3x256xf32>
    %44 = arith.mulf %42, %43 : vector<3x256xf32>
    %45 = arith.addf %39, %44 : vector<3x256xf32>
    %46 = vector.extract_strided_slice %33 {offsets = [0, 2], sizes = [3, 1], strides = [1, 1]} : vector<3x4xf32> to vector<3x1xf32>
    %47 = vector.extract_strided_slice %32 {offsets = [2, 0], sizes = [1, 256], strides = [1, 1]} : vector<4x256xf32> to vector<1x256xf32>
    %48 = vector.broadcast %46 : vector<3x1xf32> to vector<3x256xf32>
    %49 = vector.broadcast %47 : vector<1x256xf32> to vector<3x256xf32>
    %50 = arith.mulf %48, %49 : vector<3x256xf32>
    %51 = arith.addf %45, %50 : vector<3x256xf32>
    %52 = vector.extract_strided_slice %33 {offsets = [0, 3], sizes = [3, 1], strides = [1, 1]} : vector<3x4xf32> to vector<3x1xf32>
    %53 = vector.extract_strided_slice %32 {offsets = [3, 0], sizes = [1, 256], strides = [1, 1]} : vector<4x256xf32> to vector<1x256xf32>
    %54 = vector.broadcast %52 : vector<3x1xf32> to vector<3x256xf32>
    %55 = vector.broadcast %53 : vector<1x256xf32> to vector<3x256xf32>
    %56 = arith.mulf %54, %55 : vector<3x256xf32>
    %57 = arith.addf %51, %56 : vector<3x256xf32>
    %58 = vector.broadcast %34 : vector<3x1xf32> to vector<3x256xf32>
    %59 = arith.addf %57, %58 : vector<3x256xf32>
    %c0_12 = arith.constant 0 : index
    %c0_13 = arith.constant 0 : index
    %c0_14 = arith.constant 0 : index
    %60 = vector.load %arg7[%c0_12, %c0_13, %c0_14] : memref<1x3x256xf32, #tpu.memory_space<vmem>>, vector<1x3x256xf32>
    %61 = vector.shape_cast %60 : vector<1x3x256xf32> to vector<3x256xf32>
    %62 = vector.shape_cast %59 : vector<3x256xf32> to vector<1x3x256xf32>
    tpu.vector_store %arg7[%c0_12, %c0_13, %c0_14], %62 {strides = array<i32>} : memref<1x3x256xf32, #tpu.memory_space<vmem>>, vector<1x3x256xf32>,
    return
  }
  func.func @transform_0(%arg0: i32, %arg1: i32) -> (i32, i32, i32) {
    %c0_i32 = arith.constant 0 : i32
    %c0_i32_0 = arith.constant 0 : i32
    return %arg0, %c0_i32, %arg1 : i32, i32, i32
  }
  func.func @transform_1(%arg0: i32, %arg1: i32) -> (i32, i32, i32) {
    %c0_i32 = arith.constant 0 : i32
    %c0_i32_0 = arith.constant 0 : i32
    %c0_i32_1 = arith.constant 0 : i32
    %c0_i32_2 = arith.constant 0 : i32
    return %c0_i32, %c0_i32_0, %c0_i32_1 : i32, i32, i32
  }
  func.func @transform_2(%arg0: i32, %arg1: i32) -> (i32, i32, i32) {
    %c0_i32 = arith.constant 0 : i32
    %c0_i32_0 = arith.constant 0 : i32
    %c0_i32_1 = arith.constant 0 : i32
    %c0_i32_2 = arith.constant 0 : i32
    return %c0_i32, %c0_i32_0, %c0_i32_1 : i32, i32, i32
  }
  func.func @transform_3(%arg0: i32, %arg1: i32) -> (i32, i32) {
    %c0_i32 = arith.constant 0 : i32
    %c0_i32_0 = arith.constant 0 : i32
    %c0_i32_1 = arith.constant 0 : i32
    return %c0_i32, %c0_i32_0 : i32, i32
  }
  func.func @transform_4(%arg0: i32, %arg1: i32) -> (i32, i32) {
    %c0_i32 = arith.constant 0 : i32
    %c0_i32_0 = arith.constant 0 : i32
    %c0_i32_1 = arith.constant 0 : i32
    return %c0_i32, %c0_i32_0 : i32, i32
  }
  func.func @transform_5(%arg0: i32, %arg1: i32) -> (i32, i32, i32) {
    %c0_i32 = arith.constant 0 : i32
    %c0_i32_0 = arith.constant 0 : i32
    return %arg0, %c0_i32, %arg1 : i32, i32, i32
  }
}

</mosaic_0001>

<llo_original>
// kernel: tpu_custom_call.1
$region0: #{tpu_custom_call.1}
  #allocation0 [shape = 'u32[]', space=smem, size = 0x4, offset = 0x4, fixed_abs, tag = 'smem constant byte address 0x4 - core index']
  #allocation1 [shape = 'u32[144,128]{1,0:T(1,128)}', space=vmem, size = 0x12000, scoped, tag = 'internal scratch']
  %s0 = inlined_call_operand.hbm [shape: f32[2,4,256], index: 0, kind: input, shape index: {}]
  %s1 = inlined_call_operand.vmem [shape: f32[1,4,4], index: 1, kind: input, shape index: {}]
  %s2 = inlined_call_operand.vmem [shape: f32[1,4,1], index: 2, kind: input, shape index: {}]
  %s3 = inlined_call_operand.vmem [shape: f32[3,4], index: 3, kind: input, shape index: {}]
  %s4 = inlined_call_operand.vmem [shape: f32[3,1], index: 4, kind: input, shape index: {}]
  %s5 = inlined_call_operand.vmem [shape: f32[2,3,256], index: 5, kind: output, shape index: {}]
  %s6 = sld [smem:[#allocation0]]
  $region57: #{tpu_custom_call.1} parent=0
    _
  %s8 = ssub.s32 1, %s6
  %s9 = scalar_select 0, %s8, %s6
  $region1: #{tpu_custom_call.1} parent=0
    #allocation2 [shape = 'u8[8192]{0}', space=vmem, size = 0x2000, scoped, tag = 'input window, operand 0']
    #allocation3 [shape = 's32[2]{0}', space=sflag, size = 0x8, scoped, tag = 'scoped memory for tpu_custom_call.1']
    %10 = vsyncpa [#allocation3], 0
    %s11 = scalar_lea.sflag [#allocation3], 1
    %12 = vsyncpa %s11, 0
    loop: start=0, step=1, limit=4
    $region2: #{tpu_custom_call.1} parent=1 // loop_pre_header
      _
    $region3: #{tpu_custom_call.1} parent=1 // loop_header
      %s14 = sphi 0, %s18
      %p15 = scmp.ge.s32.totalorder %s14, 4
      %s21 = sphi 0, %s33
      %s22 = sphi 0, %s29
      %s23 = sphi 0, %s21
      %s24 = sphi 0, %s22
      %s25 = sphi 0, %s23
      %s26 = sphi 0, %s24
      %s38 = sphi 0, %s40
      %s41 = sphi 0, %s38
      %s42 = sphi 0, %s41
      %s58 = sphi 0, %s42
      %s62 = sphi 0, %s62
      %s64 = sphi 0, %s62
      %s65 = sphi 0, %s64
      %s79 = sphi 0, %s65
      %s83 = sphi 0, %s83
      %s85 = sphi 0, %s83
      %s86 = sphi 0, %s85
      %s100 = sphi 0, %s86
      %s104 = sphi 0, %s104
      %s106 = sphi 0, %s104
      %s107 = sphi 0, %s106
      %s121 = sphi 0, %s107
      %s125 = sphi 0, %s125
      %s127 = sphi 0, %s125
      %s128 = sphi 0, %s127
      %s142 = sphi 0, %s128
      %s150 = sphi 0, %s152
      %s153 = sphi 0, %s150
      %s154 = sphi 0, %s153
      %s170 = sphi 0, %s154
    $region4: #{tpu_custom_call.1} parent=1 // loop_header_branch
      %17 = sbr.rel (%p15) target = $region8
    $region5: #{tpu_custom_call.1} parent=1 // loop_body
      %s19 = ssub.s32 %s14, 1
      %s20 = ssub.s32 %s14, 2
      %s27 = sadd.s32 1, %s22
      %p28 = scmp.ge.s32.totalorder %s27, 1
      %s29 = scalar_select %p28, 0, %s27
      %s30 = sadd.s32 1, %s21
      %s31 = scalar_select %p28, %s30, %s21
      %p32 = scmp.ge.s32.totalorder %s31, 2
      %s33 = scalar_select %p32, 0, %s31
      %s34 = ssub.s32 %s21, %s33
      %s35 = ssub.s32 %s22, %s29
      %s36 = sor.u32 %s34, %s35
      %p37 = scmp.eq.s32.totalorder %s36, 0
      %s39 = sadd.s32 %s38, 1
      %s40 = scalar_select %p37, %s38, %s39
      %p43 = pneg %p37
      %p44 = scmp.eq.s32.totalorder %s14, 1
      %p45 = por %p43, %p44
      %p46 = scmp.ne.s32.totalorder %s38, %s41
      %p47 = scmp.eq.s32.totalorder %s14, 0
      %p48 = por %p46, %p47
      %p49 = scmp.ne.s32.totalorder %s38, %s41
      %p50 = scmp.eq.s32.totalorder %s19, 1
      %p51 = por %p49, %p50
      %p52 = scmp.ne.s32.totalorder %s41, %s42
      %p53 = scmp.eq.s32.totalorder %s19, 0
      %p54 = por %p52, %p53
      %p55 = scmp.ne.s32.totalorder %s41, %s42
      %p56 = scmp.eq.s32.totalorder %s20, 1
      %p57 = por %p55, %p56
      %p59 = scmp.ne.s32.totalorder %s42, %s58
      %p60 = scmp.eq.s32.totalorder %s20, 0
      %p61 = por %p59, %p60
      %s63 = sadd.s32 %s62, 1
      %p66 = scmp.eq.s32.totalorder %s14, 1
      %p67 = scmp.ne.s32.totalorder %s62, %s64
      %p68 = scmp.eq.s32.totalorder %s14, 0
      %p69 = por %p67, %p68
      %p70 = scmp.ne.s32.totalorder %s62, %s64
      %p71 = scmp.eq.s32.totalorder %s19, 1
      %p72 = por %p70, %p71
      %p73 = scmp.ne.s32.totalorder %s64, %s65
      %p74 = scmp.eq.s32.totalorder %s19, 0
      %p75 = por %p73, %p74
      %p76 = scmp.ne.s32.totalorder %s64, %s65
      %p77 = scmp.eq.s32.totalorder %s20, 1
      %p78 = por %p76, %p77
      %p80 = scmp.ne.s32.totalorder %s65, %s79
      %p81 = scmp.eq.s32.totalorder %s20, 0
      %p82 = por %p80, %p81
      %s84 = sadd.s32 %s83, 1
      %p87 = scmp.eq.s32.totalorder %s14, 1
      %p88 = scmp.ne.s32.totalorder %s83, %s85
      %p89 = scmp.eq.s32.totalorder %s14, 0
      %p90 = por %p88, %p89
      %p91 = scmp.ne.s32.totalorder %s83, %s85
      %p92 = scmp.eq.s32.totalorder %s19, 1
      %p93 = por %p91, %p92
      %p94 = scmp.ne.s32.totalorder %s85, %s86
      %p95 = scmp.eq.s32.totalorder %s19, 0
      %p96 = por %p94, %p95
      %p97 = scmp.ne.s32.totalorder %s85, %s86
      %p98 = scmp.eq.s32.totalorder %s20, 1
      %p99 = por %p97, %p98
      %p101 = scmp.ne.s32.totalorder %s86, %s100
      %p102 = scmp.eq.s32.totalorder %s20, 0
      %p103 = por %p101, %p102
      %s105 = sadd.s32 %s104, 1
      %p108 = scmp.eq.s32.totalorder %s14, 1
      %p109 = scmp.ne.s32.totalorder %s104, %s106
      %p110 = scmp.eq.s32.totalorder %s14, 0
      %p111 = por %p109, %p110
      %p112 = scmp.ne.s32.totalorder %s104, %s106
      %p113 = scmp.eq.s32.totalorder %s19, 1
      %p114 = por %p112, %p113
      %p115 = scmp.ne.s32.totalorder %s106, %s107
      %p116 = scmp.eq.s32.totalorder %s19, 0
      %p117 = por %p115, %p116
      %p118 = scmp.ne.s32.totalorder %s106, %s107
      %p119 = scmp.eq.s32.totalorder %s20, 1
      %p120 = por %p118, %p119
      %p122 = scmp.ne.s32.totalorder %s107, %s121
      %p123 = scmp.eq.s32.totalorder %s20, 0
      %p124 = por %p122, %p123
      %s126 = sadd.s32 %s125, 1
      %p129 = scmp.eq.s32.totalorder %s14, 1
      %p130 = scmp.ne.s32.totalorder %s125, %s127
      %p131 = scmp.eq.s32.totalorder %s14, 0
      %p132 = por %p130, %p131
      %p133 = scmp.ne.s32.totalorder %s125, %s127
      %p134 = scmp.eq.s32.totalorder %s19, 1
      %p135 = por %p133, %p134
      %p136 = scmp.ne.s32.totalorder %s127, %s128
      %p137 = scmp.eq.s32.totalorder %s19, 0
      %p138 = por %p136, %p137
      %p139 = scmp.ne.s32.totalorder %s127, %s128
      %p140 = scmp.eq.s32.totalorder %s20, 1
      %p141 = por %p139, %p140
      %p143 = scmp.ne.s32.totalorder %s128, %s142
      %p144 = scmp.eq.s32.totalorder %s20, 0
      %p145 = por %p143, %p144
      %s146 = ssub.s32 %s21, %s33
      %s147 = ssub.s32 %s22, %s29
      %s148 = sor.u32 %s146, %s147
      %p149 = scmp.eq.s32.totalorder %s148, 0
      %s151 = sadd.s32 %s150, 1
      %s152 = scalar_select %p149, %s150, %s151
      %p155 = pneg %p149
      %p156 = scmp.eq.s32.totalorder %s14, 1
      %p157 = por %p155, %p156
      %p158 = scmp.ne.s32.totalorder %s150, %s153
      %p159 = scmp.eq.s32.totalorder %s14, 0
      %p160 = por %p158, %p159
      %p161 = scmp.ne.s32.totalorder %s150, %s153
      %p162 = scmp.eq.s32.totalorder %s19, 1
      %p163 = por %p161, %p162
      %p164 = scmp.ne.s32.totalorder %s153, %s154
      %p165 = scmp.eq.s32.totalorder %s19, 0
      %p166 = por %p164, %p165
      %p167 = scmp.ne.s32.totalorder %s153, %s154
      %p168 = scmp.eq.s32.totalorder %s20, 1
      %p169 = por %p167, %p168
      %p171 = scmp.ne.s32.totalorder %s154, %s170
      %p172 = scmp.eq.s32.totalorder %s20, 0
      %p173 = por %p171, %p172
      %p174 = scmp.le.s32.totalorder 1, %s14
      %p175 = scmp.lt.s32.totalorder %s14, 3
      %p176 = pnand %p174, %p175
      %p177 = pneg %p176
      // Predicated region
      $region9: #{tpu_custom_call.1} parent=5 // pred_check
        _
      $region10: #{tpu_custom_call.1} parent=5 // pred_check_branch
        %179 = sbr.rel (%p176) target = $region12
      $region11: #{tpu_custom_call.1} parent=5 // pred_region
        %s180 = ssub.s32 %s14, 1
        // Predicated region
        $region13: #{tpu_custom_call.1} parent=11 // pred_check
          %p181 = pneg %p75
        $region14: #{tpu_custom_call.1} parent=11 // pred_check_branch
          %183 = sbr.rel (%p181) target = $region16
        $region15: #{tpu_custom_call.1} parent=11 // pred_region
          _
        $region16: #{tpu_custom_call.1} parent=11 // pred_fallthru
          _
        // Predicated region
        $region17: #{tpu_custom_call.1} parent=11 // pred_check
          %p184 = pneg %p96
        $region18: #{tpu_custom_call.1} parent=11 // pred_check_branch
          %186 = sbr.rel (%p184) target = $region20
        $region19: #{tpu_custom_call.1} parent=11 // pred_region
          _
        $region20: #{tpu_custom_call.1} parent=11 // pred_fallthru
          _
        // Predicated region
        $region21: #{tpu_custom_call.1} parent=11 // pred_check
          %p187 = pneg %p117
        $region22: #{tpu_custom_call.1} parent=11 // pred_check_branch
          %189 = sbr.rel (%p187) target = $region24
        $region23: #{tpu_custom_call.1} parent=11 // pred_region
          _
        $region24: #{tpu_custom_call.1} parent=11 // pred_fallthru
          _
        // Predicated region
        $region25: #{tpu_custom_call.1} parent=11 // pred_check
          %p190 = pneg %p138
        $region26: #{tpu_custom_call.1} parent=11 // pred_check_branch
          %192 = sbr.rel (%p190) target = $region28
        $region27: #{tpu_custom_call.1} parent=11 // pred_region
          _
        $region28: #{tpu_custom_call.1} parent=11 // pred_fallthru
          _
      $region12: #{tpu_custom_call.1} parent=5 // pred_fallthru
        _
      %p193 = scmp.lt.s32.totalorder %s14, 2
      // Predicated region
      $region29: #{tpu_custom_call.1} parent=5 // pred_check
        %p194 = pneg %p193
      $region30: #{tpu_custom_call.1} parent=5 // pred_check_branch
        %196 = sbr.rel (%p194) target = $region32
      $region31: #{tpu_custom_call.1} parent=5 // pred_region
        // Predicated region
        $region33: #{tpu_custom_call.1} parent=31 // pred_check
          %p197 = pneg %p48
        $region34: #{tpu_custom_call.1} parent=31 // pred_check_branch
          %199 = sbr.rel (%p197) target = $region36
        $region35: #{tpu_custom_call.1} parent=31 // pred_region
          %s200 = sand.u32 %s38, 1
          %s201 = scalar_lea.sflag [#allocation3], %s200
          %s202 = sand.u32 %s38, 1
          %s203 = smul.addr %s202, 8
          %s204 = scalar_lea.vmem [#allocation2], %s203
          %s205 = smul.u32 2, %s22
          %s207 = ssub.s32 128, 128
          %208 = vsyncadd %s201, %s207
          %s209 = smul.addr %s21, 2
          %s210 = sadd.s32 %s205, %s209
          %s211 = smul.addr %s210, 64
          %s212 = scalar_lea.hbm %s0, %s211
          %s214 = sshll.u32 %s204, 4
          %s215 = int_to_ptr.vmem [resolvable:$true] %s214
          %217 = dma.hbm_to_vmem [thread:$0]  %s212, 128, %s215, %s201
        $region36: #{tpu_custom_call.1} parent=31 // pred_fallthru
          _
      $region32: #{tpu_custom_call.1} parent=5 // pred_fallthru
        _
      %p218 = scmp.le.s32.totalorder 1, %s14
      %p219 = scmp.lt.s32.totalorder %s14, 3
      %p220 = pnand %p218, %p219
      %p221 = pneg %p220
      // Predicated region
      $region37: #{tpu_custom_call.1} parent=5 // pred_check
        _
      $region38: #{tpu_custom_call.1} parent=5 // pred_check_branch
        %223 = sbr.rel (%p220) target = $region40
      $region39: #{tpu_custom_call.1} parent=5 // pred_region
        %s224 = ssub.s32 %s14, 1
        %s225 = sand.u32 %s41, 1
        %s226 = scalar_lea.sflag [#allocation3], %s225
        %s227 = sand.u32 %s41, 1
        %s228 = smul.addr %s227, 8
        %s229 = scalar_lea.vmem [#allocation2], %s228
        // Predicated region
        $region41: #{tpu_custom_call.1} parent=39 // pred_check
          %p230 = pneg %p54
        $region42: #{tpu_custom_call.1} parent=39 // pred_check_branch
          %232 = sbr.rel (%p230) target = $region44
        $region43: #{tpu_custom_call.1} parent=39 // pred_region
          %233 = dma.done %s226, 128
        $region44: #{tpu_custom_call.1} parent=39 // pred_fallthru
          _
        %s234 = sand.u32 %s41, 1
        %s235 = scalar_lea.sflag [#allocation3], %s234
        %s236 = sand.u32 %s41, 1
        %s237 = smul.addr %s236, 8
        %s238 = scalar_lea.vmem [#allocation2], %s237
        %p239 = pneg %p54
        %p240 = pneg %p51
        %p241 = pneg %p75
        %p242 = pneg %p72
        %p243 = pneg %p96
        %p244 = pneg %p93
        %p245 = pneg %p117
        %p246 = pneg %p114
        %p247 = pneg %p138
        %p248 = pneg %p135
        %p249 = pneg %p166
        %p250 = pneg %p163
        %s251 = smul.u32 2, %s24
        %p252 = scmp.lt.s32.totalorder %s23, 1
        %s253 = scalar_select %p252, %s23, 1
        %p254 = scmp.lt.s32.totalorder %s251, 1
        %s255 = scalar_select %p254, %s251, 1
        %s256 = smul.addr %s253, 2
        %s257 = sadd.s32 %s255, %s256
        %s258 = smul.addr %s257, 4
        %s259 = scalar_lea.vmem %s5, %s258
        %s260 = smul.u32 2, %s24
        %s261 = smul.u32 2, %s24
        %p262 = scmp.lt.s32.totalorder %s23, 1
        %s263 = scalar_select %p262, %s23, 1
        %p264 = scmp.lt.s32.totalorder %s261, 1
        %s265 = scalar_select %p264, %s261, 1
        %s266 = smul.addr %s263, 2
        %s267 = sadd.s32 %s265, %s266
        %s268 = smul.addr %s267, 4
        %s269 = scalar_lea.vmem %s5, %s268
        %s270 = smul.u32 2, %s24
        %v271 = vld [vmem:[%s229] sm:$0xff]
        %v272 = vld [vmem:[%s1] sm:$0xf]
        %v273 = vld [vmem:[%s2] sm:$0xf]
        %275 = vset.pattern.permute.xlu0 0
        %276 = vperm.xlu0 %275, %v272
        %v277 = vpop.permute.xlu0 %276
        %v280 = vlaneseq
        %v281 = vshrl.u32 %v280, 7
        %v282 = vsub.s32 0, %v281
        %v283 = vrot.slane %v271, %v282
        %v284 = vlaneseq
        %v285 = vshrl.u32 %v284, 7
        %v286 = vsub.s32 4, %v285
        %v287 = vrot.slane %v271, %v286
        %v290 = vlaneseq
        %v291 = vshrl.u32 %v290, 7
        %v292 = vsub.s32 0, %v291
        %v293 = vrot.slane %v283, %v292
        %v294 = vlaneseq
        %v295 = vshrl.u32 %v294, 7
        %v296 = vsub.s32 0, %v295
        %v297 = vrot.slane %v287, %v296
        %v298 = vmul.f32 %v277, %v293
        %v299 = vmul.f32 %v277, %v297
        %300 = vset.pattern.permute.xlu0 1
        %301 = vperm.xlu0 %300, %v272
        %v302 = vpop.permute.xlu0 %301
        %v304 = vlaneseq
        %v305 = vshrl.u32 %v304, 7
        %v306 = vsub.s32 1, %v305
        %v307 = vrot.slane %v271, %v306
        %v308 = vlaneseq
        %v309 = vshrl.u32 %v308, 7
        %v310 = vsub.s32 5, %v309
        %v311 = vrot.slane %v271, %v310
        %v314 = vlaneseq
        %v315 = vshrl.u32 %v314, 7
        %v316 = vsub.s32 1, %v315
        %v317 = vrot.slane %v307, %v316
        %v318 = vlaneseq
        %v319 = vshrl.u32 %v318, 7
        %v320 = vsub.s32 1, %v319
        %v321 = vrot.slane %v311, %v320
        %v322 = vmul.f32 %v302, %v317
        %v323 = vmul.f32 %v302, %v321
        %v324 = vadd.f32 %v298, %v322
        %v325 = vadd.f32 %v299, %v323
        %326 = vset.pattern.permute.xlu0 2
        %327 = vperm.xlu0 %326, %v272
        %v328 = vpop.permute.xlu0 %327
        %v330 = vlaneseq
        %v331 = vshrl.u32 %v330, 7
        %v332 = vsub.s32 2, %v331
        %v333 = vrot.slane %v271, %v332
        %v334 = vlaneseq
        %v335 = vshrl.u32 %v334, 7
        %v336 = vsub.s32 6, %v335
        %v337 = vrot.slane %v271, %v336
        %v340 = vlaneseq
        %v341 = vshrl.u32 %v340, 7
        %v342 = vsub.s32 2, %v341
        %v343 = vrot.slane %v333, %v342
        %v344 = vlaneseq
        %v345 = vshrl.u32 %v344, 7
        %v346 = vsub.s32 2, %v345
        %v347 = vrot.slane %v337, %v346
        %v348 = vmul.f32 %v328, %v343
        %v349 = vmul.f32 %v328, %v347
        %v350 = vadd.f32 %v324, %v348
        %v351 = vadd.f32 %v325, %v349
        %352 = vset.pattern.permute.xlu0 3
        %353 = vperm.xlu0 %352, %v272
        %v354 = vpop.permute.xlu0 %353
        %v356 = vlaneseq
        %v357 = vshrl.u32 %v356, 7
        %v358 = vsub.s32 3, %v357
        %v359 = vrot.slane %v271, %v358
        %v360 = vlaneseq
        %v361 = vshrl.u32 %v360, 7
        %v362 = vsub.s32 7, %v361
        %v363 = vrot.slane %v271, %v362
        %v366 = vlaneseq
        %v367 = vshrl.u32 %v366, 7
        %v368 = vsub.s32 3, %v367
        %v369 = vrot.slane %v359, %v368
        %v370 = vlaneseq
        %v371 = vshrl.u32 %v370, 7
        %v372 = vsub.s32 3, %v371
        %v373 = vrot.slane %v363, %v372
        %v374 = vmul.f32 %v354, %v369
        %v375 = vmul.f32 %v354, %v373
        %v376 = vadd.f32 %v350, %v374
        %v377 = vadd.f32 %v351, %v375
        %379 = vset.pattern.permute.xlu0 0
        %380 = vperm.xlu0 %379, %v273
        %v381 = vpop.permute.xlu0 %380
        %v383 = vadd.f32 %v376, %v381
        %v384 = vadd.f32 %v377, %v381
        %v385 = vmax.f32 %v383, 0.0
        %v386 = vmax.f32 %v384, 0.0
        %v387 = vld [vmem:[%s3] sm:$0x7]
        %v388 = vld [vmem:[%s4] sm:$0x7]
        %390 = vset.pattern.permute.xlu0 0
        %391 = vperm.xlu0 %390, %v387
        %v392 = vpop.permute.xlu0 %391
        %v394 = vlaneseq
        %v395 = vshrl.u32 %v394, 7
        %v396 = vsub.s32 0, %v395
        %v397 = vrot.slane %v385, %v396
        %v398 = vlaneseq
        %v399 = vshrl.u32 %v398, 7
        %v400 = vsub.s32 0, %v399
        %v401 = vrot.slane %v386, %v400
        %v402 = vmul.f32 %v392, %v397
        %v403 = vmul.f32 %v392, %v401
        %404 = vset.pattern.permute.xlu0 1
        %405 = vperm.xlu0 %404, %v387
        %v406 = vpop.permute.xlu0 %405
        %v408 = vlaneseq
        %v409 = vshrl.u32 %v408, 7
        %v410 = vsub.s32 1, %v409
        %v411 = vrot.slane %v385, %v410
        %v412 = vlaneseq
        %v413 = vshrl.u32 %v412, 7
        %v414 = vsub.s32 1, %v413
        %v415 = vrot.slane %v386, %v414
        %v416 = vmul.f32 %v406, %v411
        %v417 = vmul.f32 %v406, %v415
        %v418 = vadd.f32 %v402, %v416
        %v419 = vadd.f32 %v403, %v417
        %420 = vset.pattern.permute.xlu0 2
        %421 = vperm.xlu0 %420, %v387
        %v422 = vpop.permute.xlu0 %421
        %v424 = vlaneseq
        %v425 = vshrl.u32 %v424, 7
        %v426 = vsub.s32 2, %v425
        %v427 = vrot.slane %v385, %v426
        %v428 = vlaneseq
        %v429 = vshrl.u32 %v428, 7
        %v430 = vsub.s32 2, %v429
        %v431 = vrot.slane %v386, %v430
        %v432 = vmul.f32 %v422, %v427
        %v433 = vmul.f32 %v422, %v431
        %v434 = vadd.f32 %v418, %v432
        %v435 = vadd.f32 %v419, %v433
        %436 = vset.pattern.permute.xlu0 3
        %437 = vperm.xlu0 %436, %v387
        %v438 = vpop.permute.xlu0 %437
        %v440 = vlaneseq
        %v441 = vshrl.u32 %v440, 7
        %v442 = vsub.s32 3, %v441
        %v443 = vrot.slane %v385, %v442
        %v444 = vlaneseq
        %v445 = vshrl.u32 %v444, 7
        %v446 = vsub.s32 3, %v445
        %v447 = vrot.slane %v386, %v446
        %v448 = vmul.f32 %v438, %v443
        %v449 = vmul.f32 %v438, %v447
        %v450 = vadd.f32 %v434, %v448
        %v451 = vadd.f32 %v435, %v449
        %453 = vset.pattern.permute.xlu0 0
        %454 = vperm.xlu0 %453, %v388
        %v455 = vpop.permute.xlu0 %454
        %v457 = vadd.f32 %v450, %v455
        %v458 = vadd.f32 %v451, %v455
        %v461 = vcombine.low %v457, %v458
        %463 = vst [vmem:[%s269] sm:$0x77] %v461
        %s464 = smul.u32 2, %s24
        %p465 = scmp.lt.s32.totalorder %s23, 1
        %s466 = scalar_select %p465, %s23, 1
        %p467 = scmp.lt.s32.totalorder %s464, 1
        %s468 = scalar_select %p467, %s464, 1
        %s469 = smul.addr %s466, 2
        %s470 = sadd.s32 %s468, %s469
        %s471 = smul.addr %s470, 4
        %s472 = scalar_lea.vmem %s5, %s471
        // Predicated region
        $region45: #{tpu_custom_call.1} parent=39 // pred_check
          %p473 = pneg %p163
        $region46: #{tpu_custom_call.1} parent=39 // pred_check_branch
          %475 = sbr.rel (%p473) target = $region48
        $region47: #{tpu_custom_call.1} parent=39 // pred_region
          %s476 = smul.u32 2, %s24
        $region48: #{tpu_custom_call.1} parent=39 // pred_fallthru
          _
      $region40: #{tpu_custom_call.1} parent=5 // pred_fallthru
        _
      %p477 = scmp.le.s32.totalorder 2, %s14
      // Predicated region
      $region49: #{tpu_custom_call.1} parent=5 // pred_check
        %p478 = pneg %p477
      $region50: #{tpu_custom_call.1} parent=5 // pred_check_branch
        %480 = sbr.rel (%p478) target = $region52
      $region51: #{tpu_custom_call.1} parent=5 // pred_region
        %s481 = ssub.s32 %s14, 2
        // Predicated region
        $region53: #{tpu_custom_call.1} parent=51 // pred_check
          %p482 = pneg %p169
        $region54: #{tpu_custom_call.1} parent=51 // pred_check_branch
          %484 = sbr.rel (%p482) target = $region56
        $region55: #{tpu_custom_call.1} parent=51 // pred_region
          %s485 = smul.u32 2, %s26
          %p486 = scmp.lt.s32.totalorder %s25, 1
          %s487 = scalar_select %p486, %s25, 1
          %p488 = scmp.lt.s32.totalorder %s485, 1
          %s489 = scalar_select %p488, %s485, 1
          %s490 = smul.addr %s487, 2
          %s491 = sadd.s32 %s489, %s490
          %s492 = smul.addr %s491, 4
          %s493 = scalar_lea.vmem %s5, %s492
        $region56: #{tpu_custom_call.1} parent=51 // pred_fallthru
          _
      $region52: #{tpu_custom_call.1} parent=5 // pred_fallthru
        _
    $region6: #{tpu_custom_call.1} parent=1 // loop_footer
      %s18 = sadd.s32 1, %s14
    $region7: #{tpu_custom_call.1} parent=1 // loop_footer_branch
      %13 = sbr.rel target = $region3
    $region8: #{tpu_custom_call.1} parent=1 // loop_exit
      _
    %494 = vsyncpa [#allocation3], 1
    %s495 = scalar_lea.sflag [#allocation3], 1
    %496 = vsyncpa %s495, 1

</llo_original>
